<compile_context>
chip_gen: v6e
topology: v6e:2x2x1
jax: 0.10.0
libtpu: 0.0.40
codegen_flags: <defaults>
</compile_context>

<pallas_src>
import jax
import jax.numpy as jnp
from jax.experimental import pallas as pl
from jax.experimental.pallas import tpu as pltpu


# MLP dims from the PyTorch module: 768 -> 1024 -> 128 -> 64 -> 16 -> 1
DIMS = (768, 1024, 128, 64, 16, 1)


def folded_mlp_kernel(x_ref, w_ref, b_ref, o_ref):
    # x_ref: (tile_b, 768) VMEM   w_ref: (1, 768) VMEM (lane-dense)
    # b_ref: (1, 1) SMEM scalar   o_ref: (tile_b, 1) VMEM
    x = x_ref[...].astype(jnp.float32)          # bf16 inputs up-cast in-register
    y = jnp.sum(x * w_ref[...], axis=-1, keepdims=True)   # VPU mul + lane reduce
    o_ref[...] = (y + b_ref[0, 0]).astype(o_ref.dtype)


def _round_up(n, m):
    return ((n + m - 1) // m) * m


def fold_params(params):
    """Collapse the affine chain. Returns (W_fold^T (1,768), b_fold (1,1))."""
    (w, b), *rest = params
    for (wk, bk) in rest:
        w = jnp.dot(w, wk, precision=jax.lax.Precision.HIGHEST)
        b = jnp.dot(b, wk, precision=jax.lax.Precision.HIGHEST) + bk
    # Transpose to a lane-dense (1, 768) layout for the kernel.
    return w.T, b


def _pick_tile_b(B):
    # Target 1.5-6 MB f32 input blocks (512-2048 rows) to amortize per-step
    # overhead, but keep >= 4 grid steps so v7x's 2 TensorCores both stay busy.
    t = max(512, min(2048, _round_up(pl.cdiv(B, 4), 8)))
    # Never exceed the (8-aligned, floor) batch; avoids oversized blocks for
    # small batches.  Minimum 8 rows (sublane granule).
    t = min(t, max(8, (B // 8) * 8))
    return t


def mlp_diff(x, params, *, tile_b=None):
    """Forward pass of MLPDiff in eval mode.

    x: (B, 768), f32 or bf16 (bf16 halves HBM traffic; accumulation is f32).
    params: list of (W, b) with W (in, out) (PyTorch weight transposed) and
    b (1, out).  Returns (B, 1) f32.
    """
    B, d_in = x.shape
    assert d_in == DIMS[0]

    w_fold, b_fold = fold_params(params)

    if tile_b is None:
        tile_b = _pick_tile_b(B)
    tile_b = max(8, _round_up(min(tile_b, max(8, (B // 8) * 8)), 8))

    grid = (pl.cdiv(B, tile_b),)   # ragged batches: partial last block, no pad
    out = pl.pallas_call(
        folded_mlp_kernel,
        out_shape=jax.ShapeDtypeStruct((B, DIMS[-1]), jnp.float32),
        grid=grid,
        in_specs=[
            # Input embedding tile, marching along the batch.
            pl.BlockSpec((tile_b, DIMS[0]), lambda i: (i, 0)),
            # Folded weight (lane-dense), same tiny block every grid step.
            pl.BlockSpec((1, DIMS[0]), lambda i: (0, 0)),
            # Folded bias as an SMEM scalar.
            pl.BlockSpec(memory_space=pltpu.MemorySpace.SMEM),
        ],
        out_specs=pl.BlockSpec((tile_b, DIMS[-1]), lambda i: (i, 0)),
        compiler_params=pltpu.CompilerParams(
            # Batch tiles are independent -> shards across v7x's 2 TensorCores.
            dimension_semantics=("parallel",),
            # Headroom for 6 MB double-buffered input blocks (safe on v5e/v6e/v7x).
            vmem_limit_bytes=32 * 1024 * 1024,
        ),
    )(x, w_fold, b_fold)
    return out


def init_params(key):
    """Deterministic synthetic init matching nn.Linear shapes (transposed)."""
    params = []
    for din, dout in zip(DIMS[:-1], DIMS[1:]):
        kw, kb, key = jax.random.split(key, 3)
        bound = 1.0 / (din ** 0.5)  # same scale family as PyTorch default init
        w = jax.random.uniform(kw, (din, dout), jnp.float32, -bound, bound)
        b = jax.random.uniform(kb, (1, dout), jnp.float32, -bound, bound)
        params.append((w, b))
    return params


def mlp_ref(x, params):
    """Layer-by-layer reference (Dropout is identity in eval mode)."""
    h = x
    for (w, b) in params:
        h = jnp.dot(h, w, precision=jax.lax.Precision.HIGHEST) + b
    return h


if __name__ == "__main__":
    key = jax.random.PRNGKey(0)
    kx, kx2, kp = jax.random.split(key, 3)
    params = init_params(kp)

    # Aligned small batch of CLIP-style embeddings.
    B = 8
    x = jax.random.normal(kx, (B, DIMS[0]), jnp.float32)
    out = jax.block_until_ready(mlp_diff(x, params))
    ref = mlp_ref(x, params)
    assert out.shape == (B, 1), out.shape
    assert jnp.allclose(out, ref, atol=1e-3, rtol=1e-3), (
        f"max abs err {jnp.max(jnp.abs(out - ref))}")

    # Ragged batch: exercises the no-pad partial-last-block path.
    B2 = 13
    x2 = jax.random.normal(kx2, (B2, DIMS[0]), jnp.float32)
    out2 = jax.block_until_ready(mlp_diff(x2, params))
    ref2 = mlp_ref(x2, params)
    assert out2.shape == (B2, 1), out2.shape
    assert jnp.allclose(out2, ref2, atol=1e-3, rtol=1e-3), (
        f"max abs err {jnp.max(jnp.abs(out2 - ref2))}")

    print("KERNEL_OK")
</pallas_src>

<mosaic_0001>
module attributes {stable_mosaic.version = 11 : i64} {
  func.func @folded_mlp_kernel(%arg0: i32, %arg1: memref<8x768xf32, #tpu.memory_space<vmem>>, %arg2: memref<1x768xf32, #tpu.memory_space<vmem>>, %arg3: memref<1x1xf32, #tpu.memory_space<smem>>, %arg4: memref<8x1xf32, #tpu.memory_space<vmem>>) attributes {dimension_semantics = [#tpu.dimension_semantics<parallel>], iteration_bounds = array<i64: 1>, scalar_prefetch = 0 : i64, scratch_operands = 0 : i64, tpu.core_type = #tpu.core_type<tc>, window_params = [{transform_indices = @transform_0, window_bounds = array<i64: 8, 768>}, {pipeline_mode = #tpu.pipeline_mode<synchronous>, transform_indices = @transform_1, window_bounds = array<i64: 1, 768>}, {transform_indices = @transform_2, window_bounds = array<i64: 1, 1>}, {transform_indices = @transform_3, window_bounds = array<i64: 8, 1>}]} {
    %c0 = arith.constant 0 : index
    %c0_0 = arith.constant 0 : index
    %0 = vector.load %arg1[%c0, %c0_0] : memref<8x768xf32, #tpu.memory_space<vmem>>, vector<8x768xf32>
    %c0_1 = arith.constant 0 : index
    %c0_2 = arith.constant 0 : index
    %1 = vector.load %arg2[%c0_1, %c0_2] : memref<1x768xf32, #tpu.memory_space<vmem>>, vector<1x768xf32>
    %2 = vector.broadcast %1 : vector<1x768xf32> to vector<8x768xf32>
    %3 = arith.mulf %0, %2 : vector<8x768xf32>
    %cst = arith.constant dense<0.000000e+00> : vector<8xf32>
    %4 = vector.multi_reduction <add>, %3, %cst [1] : vector<8x768xf32> to vector<8xf32>
    %5 = vector.shape_cast %4 : vector<8xf32> to vector<8x1xf32>
    %c0_3 = arith.constant 0 : index
    %c0_4 = arith.constant 0 : index
    %6 = memref.load %arg3[%c0_3, %c0_4] : memref<1x1xf32, #tpu.memory_space<smem>>
    %7 = vector.broadcast %6 : f32 to vector<8x1xf32>
    %8 = arith.addf %5, %7 : vector<8x1xf32>
    %c0_5 = arith.constant 0 : index
    %c0_6 = arith.constant 0 : index
    %9 = vector.load %arg4[%c0_5, %c0_6] : memref<8x1xf32, #tpu.memory_space<vmem>>, vector<8x1xf32>
    tpu.vector_store %arg4[%c0_5, %c0_6], %8 {strides = array<i32>} : memref<8x1xf32, #tpu.memory_space<vmem>>, vector<8x1xf32>,
    return
  }
  func.func @transform_0(%arg0: i32) -> (i32, i32) {
    %c0_i32 = arith.constant 0 : i32
    %c0_i32_0 = arith.constant 0 : i32
    return %arg0, %c0_i32 : i32, i32
  }
  func.func @transform_1(%arg0: i32) -> (i32, i32) {
    %c0_i32 = arith.constant 0 : i32
    %c0_i32_0 = arith.constant 0 : i32
    %c0_i32_1 = arith.constant 0 : i32
    return %c0_i32, %c0_i32_0 : i32, i32
  }
  func.func @transform_2(%arg0: i32) -> (i32, i32) {
    %c0_i32 = arith.constant 0 : i32
    %c0_i32_0 = arith.constant 0 : i32
    %c0_i32_1 = arith.constant 0 : i32
    return %c0_i32, %c0_i32_0 : i32, i32
  }
  func.func @transform_3(%arg0: i32) -> (i32, i32) {
    %c0_i32 = arith.constant 0 : i32
    %c0_i32_0 = arith.constant 0 : i32
    return %arg0, %c0_i32 : i32, i32
  }
}

</mosaic_0001>

<llo_original>
// kernel: tpu_custom_call.1
$region0: #{tpu_custom_call.1}
  #allocation0 [shape = 'u32[]', space=smem, size = 0x4, offset = 0x4, fixed_abs, tag = 'smem constant byte address 0x4 - core index']
  #allocation1 [shape = 'u32[144,128]{1,0:T(1,128)}', space=vmem, size = 0x12000, scoped, tag = 'internal scratch']
  #allocation2 [shape = 'f32[1,1]{1,0:T(1,128)S(6)}', space=smem, size = 0x200, scoped, tag = 'scoped memory for tpu_custom_call.1']
  %s0 = inlined_call_operand.hbm [shape: f32[8,768], index: 0, kind: input, shape index: {}]
  %s1 = inlined_call_operand.hbm [shape: f32[1,768], index: 1, kind: input, shape index: {}]
  %s2 = inlined_call_operand.<no memory space> [shape: f32[1,1], index: 2, kind: input, shape index: {}]
  %s3 = inlined_call_operand.vmem [shape: f32[8,1], index: 3, kind: output, shape index: {}]
  %s4 = sld [smem:[#allocation0]]
  $region30: #{tpu_custom_call.1} parent=0
    _
  %s6 = ssub.s32 1, %s4
  %s7 = scalar_select 0, %s6, %s4
  %8 = sst [smem:[#allocation2]] %s2
  $region1: #{tpu_custom_call.1} parent=0
    #allocation3 [shape = 'u8[24576]{0}', space=vmem, size = 0x6000, scoped, tag = 'input window, operand 0, single buffered']
    #allocation4 [shape = 's32[1]{0}', space=sflag, size = 0x4, scoped, tag = 'scoped memory for tpu_custom_call.1']
    #allocation5 [shape = 'u8[3072]{0}', space=vmem, size = 0xc00, scoped, tag = 'input window, operand 1, single buffered']
    #allocation6 [shape = 's32[1]{0}', space=sflag, size = 0x4, scoped, tag = 'scoped memory for tpu_custom_call.1']
    %9 = vsyncpa [#allocation4], 0
    %10 = vsyncpa [#allocation6], 0
    // Predicated region
    $region2: #{tpu_custom_call.1} parent=1 // pred_check
      _
    $region3: #{tpu_custom_call.1} parent=1 // pred_check_branch
      %12 = sbr.rel (0) target = $region5
    $region4: #{tpu_custom_call.1} parent=1 // pred_region
      %s14 = ssub.s32 768, 768
      %15 = vsyncadd [#allocation4], %s14
      %s17 = sshll.u32 [#allocation3], 4
      %s18 = int_to_ptr.vmem [resolvable:$true] %s17
      %20 = dma.hbm_to_vmem [thread:$0]  %s0, 768, %s18, [#allocation4]
    $region5: #{tpu_custom_call.1} parent=1 // pred_fallthru
      _
    // Predicated region
    $region6: #{tpu_custom_call.1} parent=1 // pred_check
      _
    $region7: #{tpu_custom_call.1} parent=1 // pred_check_branch
      %22 = sbr.rel (0) target = $region9
    $region8: #{tpu_custom_call.1} parent=1 // pred_region
      %s24 = ssub.s32 96, 96
      %25 = vsyncadd [#allocation6], %s24
      %s27 = sshll.u32 [#allocation5], 4
      %s28 = int_to_ptr.vmem [resolvable:$true] %s27
      %30 = dma.hbm_to_vmem [thread:$0]  %s1, 96, %s28, [#allocation6]
    $region9: #{tpu_custom_call.1} parent=1 // pred_fallthru
      _
    // Predicated region
    $region10: #{tpu_custom_call.1} parent=1 // pred_check
      _
    $region11: #{tpu_custom_call.1} parent=1 // pred_check_branch
      %32 = sbr.rel (0) target = $region13
    $region12: #{tpu_custom_call.1} parent=1 // pred_region
      _
    $region13: #{tpu_custom_call.1} parent=1 // pred_fallthru
      _
    // Predicated region
    $region14: #{tpu_custom_call.1} parent=1 // pred_check
      _
    $region15: #{tpu_custom_call.1} parent=1 // pred_check_branch
      %34 = sbr.rel (0) target = $region17
    $region16: #{tpu_custom_call.1} parent=1 // pred_region
      %35 = dma.done [#allocation4], 768
    $region17: #{tpu_custom_call.1} parent=1 // pred_fallthru
      _
    // Predicated region
    $region18: #{tpu_custom_call.1} parent=1 // pred_check
      _
    $region19: #{tpu_custom_call.1} parent=1 // pred_check_branch
      %37 = sbr.rel (0) target = $region21
    $region20: #{tpu_custom_call.1} parent=1 // pred_region
      %38 = dma.done [#allocation6], 96
    $region21: #{tpu_custom_call.1} parent=1 // pred_fallthru
      _
    %v39 = vld [vmem:[#allocation3] sm:$0xff]
    %v40 = vld [vmem:[#allocation3 + $0x8] sm:$0xff]
    %v41 = vld [vmem:[#allocation3 + $0x10] sm:$0xff]
    %v42 = vld [vmem:[#allocation3 + $0x18] sm:$0xff]
    %v43 = vld [vmem:[#allocation3 + $0x20] sm:$0xff]
    %v44 = vld [vmem:[#allocation3 + $0x28] sm:$0xff]
    %v45 = vld [vmem:[#allocation5] sm:$0x3f]
    %v47 = vlaneseq
    %v48 = vshrl.u32 %v47, 7
    %v49 = vsub.s32 0, %v48
    %v50 = vrot.slane %v45, %v49
    %v51 = vlaneseq
    %v52 = vshrl.u32 %v51, 7
    %v53 = vsub.s32 1, %v52
    %v54 = vrot.slane %v45, %v53
    %v55 = vlaneseq
    %v56 = vshrl.u32 %v55, 7
    %v57 = vsub.s32 2, %v56
    %v58 = vrot.slane %v45, %v57
    %v59 = vlaneseq
    %v60 = vshrl.u32 %v59, 7
    %v61 = vsub.s32 3, %v60
    %v62 = vrot.slane %v45, %v61
    %v63 = vlaneseq
    %v64 = vshrl.u32 %v63, 7
    %v65 = vsub.s32 4, %v64
    %v66 = vrot.slane %v45, %v65
    %v67 = vlaneseq
    %v68 = vshrl.u32 %v67, 7
    %v69 = vsub.s32 5, %v68
    %v70 = vrot.slane %v45, %v69
    %v77 = vmul.f32 %v39, %v50
    %v78 = vmul.f32 %v40, %v54
    %v79 = vmul.f32 %v41, %v58
    %v80 = vmul.f32 %v42, %v62
    %v81 = vmul.f32 %v43, %v66
    %v82 = vmul.f32 %v44, %v70
    %v83 = vadd.f32 %v77, %v78
    %v84 = vadd.f32 %v83, %v79
    %v85 = vadd.f32 %v84, %v80
    %v86 = vadd.f32 %v85, %v81
    %v87 = vadd.f32 %v86, %v82
    %88 = vadd.xlane.f32.xlu0 %v87
    %v89 = vpop.xlane.xlu0 %88
    %s90 = sld [smem:[#allocation2]]
    %v91 = vstv %s90
    %v92 = vadd.f32 %v89, %v91
    %vm93 = vcmask 7168
    %94 = vst.msk [vmem:[%s3] sm:$0xff] %vm93, %v92
    // Predicated region
    $region22: #{tpu_custom_call.1} parent=1 // pred_check
      _
    $region23: #{tpu_custom_call.1} parent=1 // pred_check_branch
      %96 = sbr.rel (0) target = $region25
    $region24: #{tpu_custom_call.1} parent=1 // pred_region
      _
    $region25: #{tpu_custom_call.1} parent=1 // pred_fallthru
      _
    // Predicated region
    $region26: #{tpu_custom_call.1} parent=1 // pred_check
      _
    $region27: #{tpu_custom_call.1} parent=1 // pred_check_branch
      %98 = sbr.rel (0) target = $region29
    $region28: #{tpu_custom_call.1} parent=1 // pred_region
      _
    $region29: #{tpu_custom_call.1} parent=1 // pred_fallthru
      _
    %99 = vsyncpa [#allocation4], 1
    %100 = vsyncpa [#allocation6], 1

</llo_original>
